<compile_context>
chip_gen: v5e
topology: v5e:2x2
jax: 0.10.0
libtpu: 0.0.40
codegen_flags: <defaults>
</compile_context>

<pallas_src>
import jax
import jax.numpy as jnp
from jax.experimental import pallas as pl
from jax.experimental.pallas import tpu as pltpu

OUT_SZ = 64      # vocab size (out_sz)
EMBED_SZ = 32    # embed_sz
HIDDEN_SZ = 32   # hidden_sz  (== EMBED_SZ so per-layer fused weights stack cleanly)
N_LAYERS = 2     # n_layers


def decoder_step_kernel(token_ref,                       # SMEM (1,) int32  (scalar prefetch)
                        emb_ref,                         # VMEM (V, E)
                        h_ref, c_ref,                    # VMEM (L, 1, H) each
                        w_ref,                           # VMEM (L, 2H, 4H) fused [W_ih;W_hh]^T, gates [i,f,o,g]
                        b_ref,                           # VMEM (L, 1, 4H)  b_ih + b_hh, gates [i,f,o,g]
                        wout_ref, bout_ref,              # VMEM (H, V), (1, V)
                        logp_ref, hout_ref, cout_ref):   # outputs
    H = HIDDEN_SZ
    t = token_ref[0]
    # Embedding lookup (row gather from VMEM) + F.relu, all in-kernel.
    x = jnp.maximum(emb_ref[pl.ds(t, 1), :], 0.0)        # (1, E)

    for l in range(N_LAYERS):                            # static unrolled layer loop
        h_prev = h_ref[l]                                # (1, H)
        c_prev = c_ref[l]                                # (1, H)
        xh = jnp.concatenate([x, h_prev], axis=1)        # (1, 2H)
        # Single fused MXU dot per layer: (1,2H) @ (2H,4H) + bias.
        gates = jnp.dot(xh, w_ref[l], preferred_element_type=jnp.float32) + b_ref[l]
        # Gate layout is [i, f, o, g]: one sigmoid over 3H lanes, one tanh over H lanes.
        sig = jax.nn.sigmoid(gates[:, :3 * H])
        g_g = jnp.tanh(gates[:, 3 * H:])
        i_g = sig[:, 0 * H:1 * H]
        f_g = sig[:, 1 * H:2 * H]
        o_g = sig[:, 2 * H:3 * H]
        c_new = f_g * c_prev + i_g * g_g
        h_new = o_g * jnp.tanh(c_new)
        hout_ref[l] = h_new
        cout_ref[l] = c_new
        x = h_new                                        # feed next layer

    # Linear + LogSoftmax(dim=1)
    logits = jnp.dot(x, wout_ref[...], preferred_element_type=jnp.float32) + bout_ref[...]
    m = jnp.max(logits, axis=1, keepdims=True)
    shifted = logits - m
    lse = jnp.log(jnp.sum(jnp.exp(shifted), axis=1, keepdims=True))
    logp_ref[...] = shifted - lse


@jax.jit
def decoder_forward(token, h0, c0, embedding, w_cat, b_cat, wout_t, bout):
    """token: (1,) int32; h0/c0: (L,1,H); returns (logp (1,V), h1, c1)."""
    vm = pl.BlockSpec(memory_space=pltpu.MemorySpace.VMEM)
    grid_spec = pltpu.PrefetchScalarGridSpec(
        num_scalar_prefetch=1,                 # token -> SMEM
        grid=(1,),
        in_specs=[vm] * 7,                     # embedding, h0, c0, w_cat, b_cat, wout_t, bout
        out_specs=(vm, vm, vm),
    )
    out_shapes = (
        jax.ShapeDtypeStruct((1, OUT_SZ), jnp.float32),
        jax.ShapeDtypeStruct((N_LAYERS, 1, HIDDEN_SZ), jnp.float32),
        jax.ShapeDtypeStruct((N_LAYERS, 1, HIDDEN_SZ), jnp.float32),
    )
    logp, h1, c1 = pl.pallas_call(
        decoder_step_kernel,
        out_shape=out_shapes,
        grid_spec=grid_spec,
        # flattened-input indices (token=0, embedding=1, h0=2, c0=3, ...):
        input_output_aliases={2: 1, 3: 2},     # h0 -> h_out, c0 -> c_out
        compiler_params=pltpu.CompilerParams(dimension_semantics=("arbitrary",)),
    )(token, embedding, h0, c0, w_cat, b_cat, wout_t, bout)
    return logp, h1, c1


# ----------------------------------------------------------------------------
# Host-side parameter handling (PyTorch-native layout -> fused kernel layout)
# ----------------------------------------------------------------------------
def init_params(key):
    """PyTorch-native layouts: W_ih (L,4H,E), W_hh (L,4H,H), b (L,4H),
    W_out (V,H), b_out (V,). Gate order along 4H is PyTorch's [i, f, g, o]."""
    H, E, V, L = HIDDEN_SZ, EMBED_SZ, OUT_SZ, N_LAYERS
    k = 1.0 / jnp.sqrt(jnp.float32(H))
    keys = jax.random.split(key, 8)
    embedding = jax.random.normal(keys[0], (V, E), jnp.float32)               # nn.Embedding
    wih = jax.random.uniform(keys[1], (L, 4 * H, E), jnp.float32, -k, k)      # layer0 in=E(==H)
    whh = jax.random.uniform(keys[2], (L, 4 * H, H), jnp.float32, -k, k)
    bih = jax.random.uniform(keys[3], (L, 4 * H), jnp.float32, -k, k)
    bhh = jax.random.uniform(keys[4], (L, 4 * H), jnp.float32, -k, k)
    wout = jax.random.uniform(keys[5], (V, H), jnp.float32, -k, k)            # nn.Linear
    bout = jax.random.uniform(keys[6], (V,), jnp.float32, -k, k)
    return embedding, wih, whh, bih, bhh, wout, bout


def prepare_kernel_params(embedding, wih, whh, bih, bhh, wout, bout):
    """Permute gates [i,f,g,o] -> [i,f,o,g], fuse W_ih/W_hh and the two biases,
    and transpose weights to x@W layout."""
    assert EMBED_SZ == HIDDEN_SZ, "fused weight stacking requires embed_sz == hidden_sz"
    H = HIDDEN_SZ
    perm = jnp.concatenate([jnp.arange(0, 2 * H),        # i, f
                            jnp.arange(3 * H, 4 * H),    # o
                            jnp.arange(2 * H, 3 * H)])   # g
    wih_r = wih[:, perm, :]                              # (L, 4H, E)
    whh_r = whh[:, perm, :]                              # (L, 4H, H)
    w_cat = jnp.concatenate([jnp.transpose(wih_r, (0, 2, 1)),
                             jnp.transpose(whh_r, (0, 2, 1))], axis=1)   # (L, 2H, 4H)
    b_cat = (bih + bhh)[:, perm][:, None, :]             # (L, 1, 4H)
    wout_t = wout.T                                      # (H, V)
    bout_r = bout[None, :]                               # (1, V)
    return embedding.astype(jnp.float32), w_cat, b_cat, wout_t, bout_r


def reference(token, embedding, wih, whh, bih, bhh, wout, bout, h0, c0):
    """Pure-JAX reference in PyTorch-native layout/gate order ([i,f,g,o])."""
    H = HIDDEN_SZ
    x = jnp.maximum(embedding[token].reshape(1, -1), 0.0)
    hs, cs = [], []
    for l in range(N_LAYERS):
        gates = x @ wih[l].T + h0[l] @ whh[l].T + bih[l][None, :] + bhh[l][None, :]
        i_g = jax.nn.sigmoid(gates[:, 0 * H:1 * H])
        f_g = jax.nn.sigmoid(gates[:, 1 * H:2 * H])
        g_g = jnp.tanh(gates[:, 2 * H:3 * H])
        o_g = jax.nn.sigmoid(gates[:, 3 * H:4 * H])
        c = f_g * c0[l] + i_g * g_g
        h = o_g * jnp.tanh(c)
        hs.append(h)
        cs.append(c)
        x = h
    logits = x @ wout.T + bout[None, :]
    return jax.nn.log_softmax(logits, axis=1), jnp.stack(hs), jnp.stack(cs)


if __name__ == "__main__":
    key = jax.random.PRNGKey(0)
    embedding, wih, whh, bih, bhh, wout, bout = init_params(key)
    emb_k, w_cat, b_cat, wout_t, bout_r = prepare_kernel_params(
        embedding, wih, whh, bih, bhh, wout, bout)

    token = jnp.array([3], dtype=jnp.int32)                     # single input token id
    kh, kc = jax.random.split(jax.random.PRNGKey(1))
    # Non-zero state so the W_hh / cell paths are actually exercised.
    h0 = 0.1 * jax.random.normal(kh, (N_LAYERS, 1, HIDDEN_SZ), jnp.float32)
    c0 = 0.1 * jax.random.normal(kc, (N_LAYERS, 1, HIDDEN_SZ), jnp.float32)

    logp, h1, c1 = decoder_forward(token, h0, c0, emb_k, w_cat, b_cat, wout_t, bout_r)
    jax.block_until_ready((logp, h1, c1))

    r_logp, r_h1, r_c1 = reference(token[0], embedding, wih, whh, bih, bhh,
                                   wout, bout, h0, c0)

    assert logp.shape == (1, OUT_SZ)
    assert h1.shape == (N_LAYERS, 1, HIDDEN_SZ) and c1.shape == (N_LAYERS, 1, HIDDEN_SZ)
    assert jnp.allclose(logp, r_logp, atol=2e-3, rtol=2e-3)
    assert jnp.allclose(h1, r_h1, atol=2e-3, rtol=2e-3)
    assert jnp.allclose(c1, r_c1, atol=2e-3, rtol=2e-3)

    print("KERNEL_OK")
</pallas_src>

<mosaic_0001>
module attributes {stable_mosaic.version = 11 : i64} {
  func.func @decoder_step_kernel(%arg0: i32, %arg1: memref<1xi32, #tpu.memory_space<smem>>, %arg2: memref<64x32xf32, #tpu.memory_space<vmem>>, %arg3: memref<2x1x32xf32, #tpu.memory_space<vmem>>, %arg4: memref<2x1x32xf32, #tpu.memory_space<vmem>>, %arg5: memref<2x64x128xf32, #tpu.memory_space<vmem>>, %arg6: memref<2x1x128xf32, #tpu.memory_space<vmem>>, %arg7: memref<32x64xf32, #tpu.memory_space<vmem>>, %arg8: memref<1x64xf32, #tpu.memory_space<vmem>>, %arg9: memref<1x64xf32, #tpu.memory_space<vmem>>, %arg10: memref<2x1x32xf32, #tpu.memory_space<vmem>>, %arg11: memref<2x1x32xf32, #tpu.memory_space<vmem>>) attributes {dimension_semantics = [#tpu.dimension_semantics<arbitrary>], iteration_bounds = array<i64: 1>, scalar_prefetch = 1 : i64, scratch_operands = 0 : i64, tpu.core_type = #tpu.core_type<tc>, window_params = [{pipeline_mode = #tpu.pipeline_mode<synchronous>, transform_indices = @transform_0, window_bounds = array<i64: 64, 32>}, {pipeline_mode = #tpu.pipeline_mode<synchronous>, transform_indices = @transform_1, window_bounds = array<i64: 2, 1, 32>}, {pipeline_mode = #tpu.pipeline_mode<synchronous>, transform_indices = @transform_2, window_bounds = array<i64: 2, 1, 32>}, {pipeline_mode = #tpu.pipeline_mode<synchronous>, transform_indices = @transform_3, window_bounds = array<i64: 2, 64, 128>}, {pipeline_mode = #tpu.pipeline_mode<synchronous>, transform_indices = @transform_4, window_bounds = array<i64: 2, 1, 128>}, {pipeline_mode = #tpu.pipeline_mode<synchronous>, transform_indices = @transform_5, window_bounds = array<i64: 32, 64>}, {pipeline_mode = #tpu.pipeline_mode<synchronous>, transform_indices = @transform_6, window_bounds = array<i64: 1, 64>}, {pipeline_mode = #tpu.pipeline_mode<synchronous>, transform_indices = @transform_7, window_bounds = array<i64: 1, 64>}, {pipeline_mode = #tpu.pipeline_mode<synchronous>, transform_indices = @transform_8, window_bounds = array<i64: 2, 1, 32>}, {pipeline_mode = #tpu.pipeline_mode<synchronous>, transform_indices = @transform_9, window_bounds = array<i64: 2, 1, 32>}]} {
    %c0 = arith.constant 0 : index
    %0 = memref.load %arg1[%c0] : memref<1xi32, #tpu.memory_space<smem>>
    %1 = arith.index_cast %0 : i32 to index
    %c0_0 = arith.constant 0 : index
    %2 = vector.load %arg2[%1, %c0_0] : memref<64x32xf32, #tpu.memory_space<vmem>>, vector<1x32xf32>
    %cst = arith.constant 0.000000e+00 : f32
    %3 = vector.broadcast %cst : f32 to vector<1x32xf32>
    %4 = arith.maximumf %2, %3 : vector<1x32xf32>
    %c0_1 = arith.constant 0 : index
    %c0_2 = arith.constant 0 : index
    %c0_3 = arith.constant 0 : index
    %5 = vector.load %arg3[%c0_1, %c0_2, %c0_3] : memref<2x1x32xf32, #tpu.memory_space<vmem>>, vector<1x1x32xf32>
    %6 = vector.shape_cast %5 : vector<1x1x32xf32> to vector<1x32xf32>
    %c0_4 = arith.constant 0 : index
    %c0_5 = arith.constant 0 : index
    %c0_6 = arith.constant 0 : index
    %7 = vector.load %arg4[%c0_4, %c0_5, %c0_6] : memref<2x1x32xf32, #tpu.memory_space<vmem>>, vector<1x1x32xf32>
    %8 = vector.shape_cast %7 : vector<1x1x32xf32> to vector<1x32xf32>
    %9 = tpu.concatenate %4, %6 in 1 : vector<1x32xf32>, vector<1x32xf32> -> vector<1x64xf32>
    %c0_7 = arith.constant 0 : index
    %c0_8 = arith.constant 0 : index
    %c0_9 = arith.constant 0 : index
    %10 = vector.load %arg5[%c0_7, %c0_8, %c0_9] : memref<2x64x128xf32, #tpu.memory_space<vmem>>, vector<1x64x128xf32>
    %11 = vector.shape_cast %10 : vector<1x64x128xf32> to vector<64x128xf32>
    %cst_10 = arith.constant dense<0.000000e+00> : vector<1x128xf32>
    %12 = tpu.matmul %9, %11, %cst_10 {dimension_numbers = #tpu.dot_dimension_numbers<[1], [0], [0], [1], [0, 0, 1, 1], [], []>} : vector<1x64xf32>, vector<64x128xf32>, vector<1x128xf32> -> vector<1x128xf32>
    %c0_11 = arith.constant 0 : index
    %c0_12 = arith.constant 0 : index
    %c0_13 = arith.constant 0 : index
    %13 = vector.load %arg6[%c0_11, %c0_12, %c0_13] : memref<2x1x128xf32, #tpu.memory_space<vmem>>, vector<1x1x128xf32>
    %14 = vector.shape_cast %13 : vector<1x1x128xf32> to vector<1x128xf32>
    %15 = arith.addf %12, %14 : vector<1x128xf32>
    %16 = vector.extract_strided_slice %15 {offsets = [0, 0], sizes = [1, 96], strides = [1, 1]} : vector<1x128xf32> to vector<1x96xf32>
    %17 = arith.negf %16 : vector<1x96xf32>
    %18 = math.exp %17 : vector<1x96xf32>
    %cst_14 = arith.constant 1.000000e+00 : f32
    %19 = vector.broadcast %cst_14 : f32 to vector<1x96xf32>
    %20 = arith.addf %19, %18 : vector<1x96xf32>
    %21 = arith.divf %19, %20 : vector<1x96xf32>
    %22 = vector.extract_strided_slice %15 {offsets = [0, 96], sizes = [1, 32], strides = [1, 1]} : vector<1x128xf32> to vector<1x32xf32>
    %23 = math.tanh %22 : vector<1x32xf32>
    %24 = vector.extract_strided_slice %21 {offsets = [0, 0], sizes = [1, 32], strides = [1, 1]} : vector<1x96xf32> to vector<1x32xf32>
    %25 = vector.extract_strided_slice %21 {offsets = [0, 32], sizes = [1, 32], strides = [1, 1]} : vector<1x96xf32> to vector<1x32xf32>
    %26 = vector.extract_strided_slice %21 {offsets = [0, 64], sizes = [1, 32], strides = [1, 1]} : vector<1x96xf32> to vector<1x32xf32>
    %27 = arith.mulf %25, %8 : vector<1x32xf32>
    %28 = arith.mulf %24, %23 : vector<1x32xf32>
    %29 = arith.addf %27, %28 : vector<1x32xf32>
    %30 = math.tanh %29 : vector<1x32xf32>
    %31 = arith.mulf %26, %30 : vector<1x32xf32>
    %c0_15 = arith.constant 0 : index
    %c0_16 = arith.constant 0 : index
    %c0_17 = arith.constant 0 : index
    %32 = vector.load %arg10[%c0_15, %c0_16, %c0_17] : memref<2x1x32xf32, #tpu.memory_space<vmem>>, vector<1x1x32xf32>
    %33 = vector.shape_cast %32 : vector<1x1x32xf32> to vector<1x32xf32>
    %34 = vector.shape_cast %31 : vector<1x32xf32> to vector<1x1x32xf32>
    tpu.vector_store %arg10[%c0_15, %c0_16, %c0_17], %34 {strides = array<i32>} : memref<2x1x32xf32, #tpu.memory_space<vmem>>, vector<1x1x32xf32>,
    %c0_18 = arith.constant 0 : index
    %c0_19 = arith.constant 0 : index
    %c0_20 = arith.constant 0 : index
    %35 = vector.load %arg11[%c0_18, %c0_19, %c0_20] : memref<2x1x32xf32, #tpu.memory_space<vmem>>, vector<1x1x32xf32>
    %36 = vector.shape_cast %35 : vector<1x1x32xf32> to vector<1x32xf32>
    %37 = vector.shape_cast %29 : vector<1x32xf32> to vector<1x1x32xf32>
    tpu.vector_store %arg11[%c0_18, %c0_19, %c0_20], %37 {strides = array<i32>} : memref<2x1x32xf32, #tpu.memory_space<vmem>>, vector<1x1x32xf32>,
    %c1 = arith.constant 1 : index
    %c0_21 = arith.constant 0 : index
    %c0_22 = arith.constant 0 : index
    %38 = vector.load %arg3[%c1, %c0_21, %c0_22] : memref<2x1x32xf32, #tpu.memory_space<vmem>>, vector<1x1x32xf32>
    %39 = vector.shape_cast %38 : vector<1x1x32xf32> to vector<1x32xf32>
    %c1_23 = arith.constant 1 : index
    %c0_24 = arith.constant 0 : index
    %c0_25 = arith.constant 0 : index
    %40 = vector.load %arg4[%c1_23, %c0_24, %c0_25] : memref<2x1x32xf32, #tpu.memory_space<vmem>>, vector<1x1x32xf32>
    %41 = vector.shape_cast %40 : vector<1x1x32xf32> to vector<1x32xf32>
    %42 = tpu.concatenate %31, %39 in 1 : vector<1x32xf32>, vector<1x32xf32> -> vector<1x64xf32>
    %c1_26 = arith.constant 1 : index
    %c0_27 = arith.constant 0 : index
    %c0_28 = arith.constant 0 : index
    %43 = vector.load %arg5[%c1_26, %c0_27, %c0_28] : memref<2x64x128xf32, #tpu.memory_space<vmem>>, vector<1x64x128xf32>
    %44 = vector.shape_cast %43 : vector<1x64x128xf32> to vector<64x128xf32>
    %cst_29 = arith.constant dense<0.000000e+00> : vector<1x128xf32>
    %45 = tpu.matmul %42, %44, %cst_29 {dimension_numbers = #tpu.dot_dimension_numbers<[1], [0], [0], [1], [0, 0, 1, 1], [], []>} : vector<1x64xf32>, vector<64x128xf32>, vector<1x128xf32> -> vector<1x128xf32>
    %c1_30 = arith.constant 1 : index
    %c0_31 = arith.constant 0 : index
    %c0_32 = arith.constant 0 : index
    %46 = vector.load %arg6[%c1_30, %c0_31, %c0_32] : memref<2x1x128xf32, #tpu.memory_space<vmem>>, vector<1x1x128xf32>
    %47 = vector.shape_cast %46 : vector<1x1x128xf32> to vector<1x128xf32>
    %48 = arith.addf %45, %47 : vector<1x128xf32>
    %49 = vector.extract_strided_slice %48 {offsets = [0, 0], sizes = [1, 96], strides = [1, 1]} : vector<1x128xf32> to vector<1x96xf32>
    %50 = arith.negf %49 : vector<1x96xf32>
    %51 = math.exp %50 : vector<1x96xf32>
    %cst_33 = arith.constant 1.000000e+00 : f32
    %52 = vector.broadcast %cst_33 : f32 to vector<1x96xf32>
    %53 = arith.addf %52, %51 : vector<1x96xf32>
    %54 = arith.divf %52, %53 : vector<1x96xf32>
    %55 = vector.extract_strided_slice %48 {offsets = [0, 96], sizes = [1, 32], strides = [1, 1]} : vector<1x128xf32> to vector<1x32xf32>
    %56 = math.tanh %55 : vector<1x32xf32>
    %57 = vector.extract_strided_slice %54 {offsets = [0, 0], sizes = [1, 32], strides = [1, 1]} : vector<1x96xf32> to vector<1x32xf32>
    %58 = vector.extract_strided_slice %54 {offsets = [0, 32], sizes = [1, 32], strides = [1, 1]} : vector<1x96xf32> to vector<1x32xf32>
    %59 = vector.extract_strided_slice %54 {offsets = [0, 64], sizes = [1, 32], strides = [1, 1]} : vector<1x96xf32> to vector<1x32xf32>
    %60 = arith.mulf %58, %41 : vector<1x32xf32>
    %61 = arith.mulf %57, %56 : vector<1x32xf32>
    %62 = arith.addf %60, %61 : vector<1x32xf32>
    %63 = math.tanh %62 : vector<1x32xf32>
    %64 = arith.mulf %59, %63 : vector<1x32xf32>
    %c1_34 = arith.constant 1 : index
    %c0_35 = arith.constant 0 : index
    %c0_36 = arith.constant 0 : index
    %65 = vector.load %arg10[%c1_34, %c0_35, %c0_36] : memref<2x1x32xf32, #tpu.memory_space<vmem>>, vector<1x1x32xf32>
    %66 = vector.shape_cast %65 : vector<1x1x32xf32> to vector<1x32xf32>
    %67 = vector.shape_cast %64 : vector<1x32xf32> to vector<1x1x32xf32>
    tpu.vector_store %arg10[%c1_34, %c0_35, %c0_36], %67 {strides = array<i32>} : memref<2x1x32xf32, #tpu.memory_space<vmem>>, vector<1x1x32xf32>,
    %c1_37 = arith.constant 1 : index
    %c0_38 = arith.constant 0 : index
    %c0_39 = arith.constant 0 : index
    %68 = vector.load %arg11[%c1_37, %c0_38, %c0_39] : memref<2x1x32xf32, #tpu.memory_space<vmem>>, vector<1x1x32xf32>
    %69 = vector.shape_cast %68 : vector<1x1x32xf32> to vector<1x32xf32>
    %70 = vector.shape_cast %62 : vector<1x32xf32> to vector<1x1x32xf32>
    tpu.vector_store %arg11[%c1_37, %c0_38, %c0_39], %70 {strides = array<i32>} : memref<2x1x32xf32, #tpu.memory_space<vmem>>, vector<1x1x32xf32>,
    %c0_40 = arith.constant 0 : index
    %c0_41 = arith.constant 0 : index
    %71 = vector.load %arg7[%c0_40, %c0_41] : memref<32x64xf32, #tpu.memory_space<vmem>>, vector<32x64xf32>
    %cst_42 = arith.constant dense<0.000000e+00> : vector<1x64xf32>
    %72 = tpu.matmul %64, %71, %cst_42 {dimension_numbers = #tpu.dot_dimension_numbers<[1], [0], [0], [1], [0, 0, 1, 1], [], []>} : vector<1x32xf32>, vector<32x64xf32>, vector<1x64xf32> -> vector<1x64xf32>
    %c0_43 = arith.constant 0 : index
    %c0_44 = arith.constant 0 : index
    %73 = vector.load %arg8[%c0_43, %c0_44] : memref<1x64xf32, #tpu.memory_space<vmem>>, vector<1x64xf32>
    %74 = arith.addf %72, %73 : vector<1x64xf32>
    %cst_45 = arith.constant dense<0xFF800000> : vector<1xf32>
    %75 = vector.multi_reduction <maximumf>, %74, %cst_45 [1] : vector<1x64xf32> to vector<1xf32>
    %76 = vector.shape_cast %75 : vector<1xf32> to vector<1x1xf32>
    %77 = vector.broadcast %76 : vector<1x1xf32> to vector<1x64xf32>
    %78 = arith.subf %74, %77 : vector<1x64xf32>
    %79 = math.exp %78 : vector<1x64xf32>
    %cst_46 = arith.constant dense<0.000000e+00> : vector<1xf32>
    %80 = vector.multi_reduction <add>, %79, %cst_46 [1] : vector<1x64xf32> to vector<1xf32>
    %81 = vector.shape_cast %80 : vector<1xf32> to vector<1x1xf32>
    %82 = math.log %81 : vector<1x1xf32>
    %83 = vector.broadcast %82 : vector<1x1xf32> to vector<1x64xf32>
    %84 = arith.subf %78, %83 : vector<1x64xf32>
    %c0_47 = arith.constant 0 : index
    %c0_48 = arith.constant 0 : index
    %85 = vector.load %arg9[%c0_47, %c0_48] : memref<1x64xf32, #tpu.memory_space<vmem>>, vector<1x64xf32>
    tpu.vector_store %arg9[%c0_47, %c0_48], %84 {strides = array<i32>} : memref<1x64xf32, #tpu.memory_space<vmem>>, vector<1x64xf32>,
    return
  }
  func.func @transform_0(%arg0: i32, %arg1: memref<1xi32, #tpu.memory_space<smem>>) -> (i32, i32) {
    %c0_i32 = arith.constant 0 : i32
    %c0_i32_0 = arith.constant 0 : i32
    %c0_i32_1 = arith.constant 0 : i32
    return %c0_i32, %c0_i32_0 : i32, i32
  }
  func.func @transform_1(%arg0: i32, %arg1: memref<1xi32, #tpu.memory_space<smem>>) -> (i32, i32, i32) {
    %c0_i32 = arith.constant 0 : i32
    %c0_i32_0 = arith.constant 0 : i32
    %c0_i32_1 = arith.constant 0 : i32
    %c0_i32_2 = arith.constant 0 : i32
    return %c0_i32, %c0_i32_0, %c0_i32_1 : i32, i32, i32
  }
  func.func @transform_2(%arg0: i32, %arg1: memref<1xi32, #tpu.memory_space<smem>>) -> (i32, i32, i32) {
    %c0_i32 = arith.constant 0 : i32
    %c0_i32_0 = arith.constant 0 : i32
    %c0_i32_1 = arith.constant 0 : i32
    %c0_i32_2 = arith.constant 0 : i32
    return %c0_i32, %c0_i32_0, %c0_i32_1 : i32, i32, i32
  }
  func.func @transform_3(%arg0: i32, %arg1: memref<1xi32, #tpu.memory_space<smem>>) -> (i32, i32, i32) {
    %c0_i32 = arith.constant 0 : i32
    %c0_i32_0 = arith.constant 0 : i32
    %c0_i32_1 = arith.constant 0 : i32
    %c0_i32_2 = arith.constant 0 : i32
    return %c0_i32, %c0_i32_0, %c0_i32_1 : i32, i32, i32
  }
  func.func @transform_4(%arg0: i32, %arg1: memref<1xi32, #tpu.memory_space<smem>>) -> (i32, i32, i32) {
    %c0_i32 = arith.constant 0 : i32
    %c0_i32_0 = arith.constant 0 : i32
    %c0_i32_1 = arith.constant 0 : i32
    %c0_i32_2 = arith.constant 0 : i32
    return %c0_i32, %c0_i32_0, %c0_i32_1 : i32, i32, i32
  }
  func.func @transform_5(%arg0: i32, %arg1: memref<1xi32, #tpu.memory_space<smem>>) -> (i32, i32) {
    %c0_i32 = arith.constant 0 : i32
    %c0_i32_0 = arith.constant 0 : i32
    %c0_i32_1 = arith.constant 0 : i32
    return %c0_i32, %c0_i32_0 : i32, i32
  }
  func.func @transform_6(%arg0: i32, %arg1: memref<1xi32, #tpu.memory_space<smem>>) -> (i32, i32) {
    %c0_i32 = arith.constant 0 : i32
    %c0_i32_0 = arith.constant 0 : i32
    %c0_i32_1 = arith.constant 0 : i32
    return %c0_i32, %c0_i32_0 : i32, i32
  }
  func.func @transform_7(%arg0: i32, %arg1: memref<1xi32, #tpu.memory_space<smem>>) -> (i32, i32) {
    %c0_i32 = arith.constant 0 : i32
    %c0_i32_0 = arith.constant 0 : i32
    %c0_i32_1 = arith.constant 0 : i32
    return %c0_i32, %c0_i32_0 : i32, i32
  }
  func.func @transform_8(%arg0: i32, %arg1: memref<1xi32, #tpu.memory_space<smem>>) -> (i32, i32, i32) {
    %c0_i32 = arith.constant 0 : i32
    %c0_i32_0 = arith.constant 0 : i32
    %c0_i32_1 = arith.constant 0 : i32
    %c0_i32_2 = arith.constant 0 : i32
    return %c0_i32, %c0_i32_0, %c0_i32_1 : i32, i32, i32
  }
  func.func @transform_9(%arg0: i32, %arg1: memref<1xi32, #tpu.memory_space<smem>>) -> (i32, i32, i32) {
    %c0_i32 = arith.constant 0 : i32
    %c0_i32_0 = arith.constant 0 : i32
    %c0_i32_1 = arith.constant 0 : i32
    %c0_i32_2 = arith.constant 0 : i32
    return %c0_i32, %c0_i32_0, %c0_i32_1 : i32, i32, i32
  }
}

</mosaic_0001>

<llo_original>
// kernel: decoder_forward.1
$region0: #{decoder_forward.1}
  #allocation0 [shape = 'u32[]', space=smem, size = 0x4, offset = 0x4, fixed_abs, tag = 'smem constant byte address 0x4 - core index']
  #allocation1 [shape = 'u32[72,128]{1,0:T(1,128)}', space=vmem, size = 0x9000, scoped, tag = 'internal scratch']
  #allocation2 [shape = 's32[1]{0}', space=sflag, size = 0x4, scoped, tag = 'scoped memory for decoder_forward.1']
  #allocation3 [shape = 's32[1]{0:T(128)S(6)}', space=smem, size = 0x200, scoped, tag = 'prefetched SMEM operand 0']
  %s0 = inlined_call_operand.<no memory space> [shape: s32[1], index: 0, kind: input, shape index: {}]
  %s1 = inlined_call_operand.vmem [shape: f32[64,32], index: 1, kind: input, shape index: {}]
  %s2 = inlined_call_operand.hbm [shape: f32[2,1,32], index: 2, kind: input, shape index: {}, may-alias: {2,9}]
  %s3 = inlined_call_operand.hbm [shape: f32[2,1,32], index: 3, kind: input, shape index: {}, may-alias: {3,10}]
  %s4 = inlined_call_operand.hbm [shape: f32[2,64,128], index: 4, kind: input, shape index: {}]
  %s5 = inlined_call_operand.vmem [shape: f32[2,1,128], index: 5, kind: input, shape index: {}]
  %s6 = inlined_call_operand.vmem [shape: f32[32,64], index: 6, kind: input, shape index: {}]
  %s7 = inlined_call_operand.vmem [shape: f32[1,64], index: 7, kind: input, shape index: {}]
  %s8 = inlined_call_operand.hbm [shape: f32[1,64], index: 8, kind: output, shape index: {0}]
  %s9 = inlined_call_operand.hbm [shape: f32[2,1,32], index: 9, kind: output, shape index: {1}, may-alias: {2,9}]
  %s10 = inlined_call_operand.hbm [shape: f32[2,1,32], index: 10, kind: output, shape index: {2}, may-alias: {3,10}]
  %11 = xla_tuple %s8, %s9, %s10
  %s12 = sld [smem:[#allocation0]]
  $region66: #{decoder_forward.1} parent=0
    _
  %s14 = ssub.s32 1, %s12
  %s15 = scalar_select 0, %s14, %s12
  %16 = sst [smem:[#allocation3]] %s0
  $region1: #{decoder_forward.1} parent=0
    #allocation4 [shape = 'u8[1024]{0}', space=vmem, size = 0x400, scoped, tag = 'input window, operand 2, single buffered']
    #allocation5 [shape = 's32[1]{0}', space=sflag, size = 0x4, scoped, tag = 'scoped memory for decoder_forward.1']
    #allocation6 [shape = 's32[1]{0}', space=sflag, size = 0x4, scoped, tag = 'scoped memory for decoder_forward.1']
    #allocation7 [shape = 'u8[1024]{0}', space=vmem, size = 0x400, scoped, tag = 'input window, operand 3, single buffered']
    #allocation8 [shape = 's32[1]{0}', space=sflag, size = 0x4, scoped, tag = 'scoped memory for decoder_forward.1']
    #allocation9 [shape = 'u8[65536]{0}', space=vmem, size = 0x10000, scoped, tag = 'input window, operand 4, single buffered']
    #allocation10 [shape = 'u8[512]{0}', space=vmem, size = 0x400, scoped, tag = 'output window, operand 0, single buffered']
    #allocation11 [shape = 'u8[1024]{0}', space=vmem, size = 0x400, scoped, tag = 'output window, operand 1, single buffered']
    #allocation12 [shape = 's32[1]{0}', space=sflag, size = 0x4, scoped, tag = 'scoped memory for decoder_forward.1']
    #allocation13 [shape = 'u8[1024]{0}', space=vmem, size = 0x400, scoped, tag = 'output window, operand 2, single buffered']
    %17 = vsyncpa [#allocation5], 0
    %18 = vsyncpa [#allocation8], 0
    %19 = vsyncpa [#allocation6], 0
    %20 = vsyncpa [#allocation12], 0
    // Predicated region
    $region2: #{decoder_forward.1} parent=1 // pred_check
      _
    $region3: #{decoder_forward.1} parent=1 // pred_check_branch
      %22 = sbr.rel (0) target = $region5
    $region4: #{decoder_forward.1} parent=1 // pred_region
      _
    $region5: #{decoder_forward.1} parent=1 // pred_fallthru
      _
    // Predicated region
    $region6: #{decoder_forward.1} parent=1 // pred_check
      _
    $region7: #{decoder_forward.1} parent=1 // pred_check_branch
      %24 = sbr.rel (0) target = $region9
    $region8: #{decoder_forward.1} parent=1 // pred_region
      %26 = vsyncadd [#allocation5], 0
      %s27 = sshll.u32 %s2, 4
      %s28 = int_to_ptr.hbm [resolvable:$true] %s27
      %s29 = sshll.u32 [#allocation4], 4
      %s30 = int_to_ptr.vmem [resolvable:$true] %s29
      %35 = dma.hbm_to_vmem [thread:$0]  %s28, 32, %s30, [#allocation5], 16, 16, 1
    $region9: #{decoder_forward.1} parent=1 // pred_fallthru
      _
    // Predicated region
    $region10: #{decoder_forward.1} parent=1 // pred_check
      _
    $region11: #{decoder_forward.1} parent=1 // pred_check_branch
      %37 = sbr.rel (0) target = $region13
    $region12: #{decoder_forward.1} parent=1 // pred_region
      %39 = vsyncadd [#allocation8], 0
      %s40 = sshll.u32 %s3, 4
      %s41 = int_to_ptr.hbm [resolvable:$true] %s40
      %s42 = sshll.u32 [#allocation7], 4
      %s43 = int_to_ptr.vmem [resolvable:$true] %s42
      %48 = dma.hbm_to_vmem [thread:$0]  %s41, 32, %s43, [#allocation8], 16, 16, 1
    $region13: #{decoder_forward.1} parent=1 // pred_fallthru
      _
    // Predicated region
    $region14: #{decoder_forward.1} parent=1 // pred_check
      _
    $region15: #{decoder_forward.1} parent=1 // pred_check_branch
      %50 = sbr.rel (0) target = $region17
    $region16: #{decoder_forward.1} parent=1 // pred_region
      %52 = vsyncadd [#allocation8], 0
      %s53 = sshll.u32 %s4, 4
      %s54 = int_to_ptr.hbm [resolvable:$true] %s53
      %s55 = sshll.u32 [#allocation9], 4
      %s56 = int_to_ptr.vmem [resolvable:$true] %s55
      %61 = dma.hbm_to_vmem [thread:$0]  %s54, 2048, %s56, [#allocation8], 128, 128, 8
    $region17: #{decoder_forward.1} parent=1 // pred_fallthru
      _
    // Predicated region
    $region18: #{decoder_forward.1} parent=1 // pred_check
      _
    $region19: #{decoder_forward.1} parent=1 // pred_check_branch
      %63 = sbr.rel (0) target = $region21
    $region20: #{decoder_forward.1} parent=1 // pred_region
      _
    $region21: #{decoder_forward.1} parent=1 // pred_fallthru
      _
    // Predicated region
    $region22: #{decoder_forward.1} parent=1 // pred_check
      _
    $region23: #{decoder_forward.1} parent=1 // pred_check_branch
      %65 = sbr.rel (0) target = $region25
    $region24: #{decoder_forward.1} parent=1 // pred_region
      _
    $region25: #{decoder_forward.1} parent=1 // pred_fallthru
      _
    // Predicated region
    $region26: #{decoder_forward.1} parent=1 // pred_check
      _
    $region27: #{decoder_forward.1} parent=1 // pred_check_branch
      %67 = sbr.rel (0) target = $region29
    $region28: #{decoder_forward.1} parent=1 // pred_region
      _
    $region29: #{decoder_forward.1} parent=1 // pred_fallthru
      _
    // Predicated region
    $region30: #{decoder_forward.1} parent=1 // pred_check
      _
    $region31: #{decoder_forward.1} parent=1 // pred_check_branch
      %69 = sbr.rel (0) target = $region33
    $region32: #{decoder_forward.1} parent=1 // pred_region
      %71 = dma.done [#allocation5], 32
    $region33: #{decoder_forward.1} parent=1 // pred_fallthru
      _
    // Predicated region
    $region34: #{decoder_forward.1} parent=1 // pred_check
      _
    $region35: #{decoder_forward.1} parent=1 // pred_check_branch
      %73 = sbr.rel (0) target = $region37
    $region36: #{decoder_forward.1} parent=1 // pred_region
      %75 = dma.done [#allocation8], 32
    $region37: #{decoder_forward.1} parent=1 // pred_fallthru
      _
    // Predicated region
    $region38: #{decoder_forward.1} parent=1 // pred_check
      _
    $region39: #{decoder_forward.1} parent=1 // pred_check_branch
      %77 = sbr.rel (0) target = $region41
    $region40: #{decoder_forward.1} parent=1 // pred_region
      %79 = dma.done [#allocation8], 2048
    $region41: #{decoder_forward.1} parent=1 // pred_fallthru
      _
    %s80 = sld [smem:[#allocation3]]
    %s81 = scalar_lea.vmem %s1, %s80
    %v82 = vld [vmem:[%s81] sm:$0x1]
    %v83 = vmax.f32 %v82, 0.0
    %v84 = vld [vmem:[#allocation4] sm:$0x1]
    %v85 = vld [vmem:[#allocation7] sm:$0x1]
    %v87 = vperm.slane %v84, 0
    %88 = vrot.lane.b32.xlu0 %v87, 32
    %v89 = vpop.permute.xlu0 %88
    %vm91 = vcmask 261120
    %v92 = vsel %vm91, %v83, %v89
    %v93 = vld [vmem:[#allocation9] sm:$0xff]
    %v94 = vld [vmem:[#allocation9 + $0x8] sm:$0xff]
    %v95 = vld [vmem:[#allocation9 + $0x10] sm:$0xff]
    %v96 = vld [vmem:[#allocation9 + $0x18] sm:$0xff]
    %v97 = vld [vmem:[#allocation9 + $0x20] sm:$0xff]
    %v98 = vld [vmem:[#allocation9 + $0x28] sm:$0xff]
    %v99 = vld [vmem:[#allocation9 + $0x30] sm:$0xff]
    %v100 = vld [vmem:[#allocation9 + $0x38] sm:$0xff]
    %v101 = vld [vmem:[%s5] sm:$0x1]
    %vm102 = vcmask 523264
    %v104 = vsel %vm102, %v92, 0
    %106 = vmatpush.msra.mxu0 0.0
    %107 = vmatpush.msra.mxu0 0.0
    %108 = vmatpush.msra.mxu0 0.0
    %109 = vmatpush.msra.mxu0 0.0
    %110 = vmatpush.msra.mxu0 0.0
    %111 = vmatpush.msra.mxu0 0.0
    %112 = vmatpush.msra.mxu0 0.0
    %113 = vmatpush.msra.mxu0 0.0
    %114 = vmatpush.msra.mxu0 %v100
    %115 = vmatpush.msra.mxu0 %v99
    %116 = vmatpush.msra.mxu0 %v98
    %117 = vmatpush.msra.mxu0 %v97
    %118 = vmatpush.msra.mxu0 %v96
    %119 = vmatpush.msra.mxu0 %v95
    %120 = vmatpush.msra.mxu0 %v94
    %121 = vmatpush.msra.mxu0 %v93
    %122 = vmatmul.f32.gmra.mxu0 %v104
    %v123 = vpop.f32.mrf.mxu0
    %v124 = vadd.f32 %v101, %v123
    %125 = vdwg.mxu0
    %v126 = vxor.u32 %v124, 2147483648
    %v127 = vmul.f32 %v126, 1.442695
    %v128 = vpow.pop %v127
    %v129 = vadd.f32 %v128, 1.0
    %v130 = vrcp.pop %v129
    %v131 = vmul.f32 %v129, %v130
    %v132 = vsub.f32 1.0, %v131
    %v133 = vmul.f32 %v130, %v132
    %v134 = vadd.f32 %v130, %v133
    %vm135 = vweird.f32 %v129
    %vm136 = vweird.f32 %v130
    %vm137 = vmor %vm135, %vm136
    %v138 = vsel %vm137, %v130, %v134
    %v139 = vand.u32 2147483647, %v129
    %vm140 = vcmp.eq.f32.partialorder %v139, 8.507059e+37
    %v141 = vand.u32 %v129, 2147483648
    %v142 = vor.u32 1.1754944e-38, %v141
    %v143 = vsel %vm140, %v142, %v138
    %v144 = vmul.f32 1.0, %v143
    %v145 = vtanh.pop %v124
    %v147 = vperm.slane %v85, 0
    %148 = vrot.lane.b32.xlu0 %v147, 32
    %v149 = vpop.permute.xlu0 %148
    %v151 = vmul.f32 %v144, %v149
    %153 = vrot.lane.b32.xlu0 %v145, 32
    %v154 = vpop.permute.xlu0 %153
    %v156 = vmul.f32 %v144, %v154
    %158 = vrot.lane.b32.xlu0 %v156, 32
    %v159 = vpop.permute.xlu0 %158
    %v161 = vadd.f32 %v151, %v159
    %v162 = vtanh.pop %v161
    %164 = vrot.lane.b32.xlu0 %v162, 32
    %v165 = vpop.permute.xlu0 %164
    %v167 = vmul.f32 %v144, %v165
    %169 = vrot.lane.b32.xlu0 %v167, 64
    %v170 = vpop.permute.xlu0 %169
    %vm172 = vcmask 253952
    %173 = vst.msk [vmem:[#allocation11] sm:$0x1] %vm172, %v170
    %175 = vrot.lane.b32.xlu0 %v161, 96
    %v176 = vpop.permute.xlu0 %175
    %178 = vst.msk [vmem:[#allocation13] sm:$0x1] %vm172, %v176
    %s179 = scalar_lea.vmem [#allocation4], 1
    %v180 = vld [vmem:[%s179] sm:$0x1]
    %s181 = scalar_lea.vmem [#allocation7], 1
    %v182 = vld [vmem:[%s181] sm:$0x1]
    %v184 = vperm.slane %v180, 0
    %185 = vrot.lane.b32.xlu0 %v184, 32
    %v186 = vpop.permute.xlu0 %185
    %v188 = vsel %vm91, %v170, %v186
    %s189 = scalar_lea.vmem [#allocation9], 64
    %v190 = vld [vmem:[%s189] sm:$0xff]
    %v191 = vld [vmem:[%s189 + $0x8] sm:$0xff]
    %v192 = vld [vmem:[%s189 + $0x10] sm:$0xff]
    %v193 = vld [vmem:[%s189 + $0x18] sm:$0xff]
    %v194 = vld [vmem:[%s189 + $0x20] sm:$0xff]
    %v195 = vld [vmem:[%s189 + $0x28] sm:$0xff]
    %v196 = vld [vmem:[%s189 + $0x30] sm:$0xff]
    %v197 = vld [vmem:[%s189 + $0x38] sm:$0xff]
    %s198 = scalar_lea.vmem %s5, 1
    %v199 = vld [vmem:[%s198] sm:$0x1]
    %v201 = vsel %vm102, %v188, 0
    %203 = vmatpush.msra.mxu0 0.0
    %204 = vmatpush.msra.mxu0 0.0
    %205 = vmatpush.msra.mxu0 0.0
    %206 = vmatpush.msra.mxu0 0.0
    %207 = vmatpush.msra.mxu0 0.0
    %208 = vmatpush.msra.mxu0 0.0
    %209 = vmatpush.msra.mxu0 0.0
    %210 = vmatpush.msra.mxu0 0.0
    %211 = vmatpush.msra.mxu0 %v197
    %212 = vmatpush.msra.mxu0 %v196
    %213 = vmatpush.msra.mxu0 %v195
    %214 = vmatpush.msra.mxu0 %v194
    %215 = vmatpush.msra.mxu0 %v193
    %216 = vmatpush.msra.mxu0 %v192
    %217 = vmatpush.msra.mxu0 %v191
    %218 = vmatpush.msra.mxu0 %v190
    %219 = vmatmul.f32.gmra.mxu0 %v201
    %v220 = vpop.f32.mrf.mxu0
    %v221 = vadd.f32 %v199, %v220
    %222 = vdwg.mxu0
    %v223 = vxor.u32 %v221, 2147483648
    %v224 = vmul.f32 %v223, 1.442695
    %v225 = vpow.pop %v224
    %v226 = vadd.f32 %v225, 1.0
    %v227 = vrcp.pop %v226
    %v228 = vmul.f32 %v226, %v227
    %v229 = vsub.f32 1.0, %v228
    %v230 = vmul.f32 %v227, %v229
    %v231 = vadd.f32 %v227, %v230
    %vm232 = vweird.f32 %v226
    %vm233 = vweird.f32 %v227
    %vm234 = vmor %vm232, %vm233
    %v235 = vsel %vm234, %v227, %v231
    %v236 = vand.u32 2147483647, %v226
    %vm237 = vcmp.eq.f32.partialorder %v236, 8.507059e+37
    %v238 = vand.u32 %v226, 2147483648
    %v239 = vor.u32 1.1754944e-38, %v238
    %v240 = vsel %vm237, %v239, %v235
    %v241 = vmul.f32 1.0, %v240
    %v242 = vtanh.pop %v221
    %v244 = vperm.slane %v182, 0
    %245 = vrot.lane.b32.xlu0 %v244, 32
    %v246 = vpop.permute.xlu0 %245
    %v248 = vmul.f32 %v241, %v246
    %250 = vrot.lane.b32.xlu0 %v242, 32
    %v251 = vpop.permute.xlu0 %250
    %v253 = vmul.f32 %v241, %v251
    %255 = vrot.lane.b32.xlu0 %v253, 32
    %v256 = vpop.permute.xlu0 %255
    %v258 = vadd.f32 %v248, %v256
    %v259 = vtanh.pop %v258
    %261 = vrot.lane.b32.xlu0 %v259, 32
    %v262 = vpop.permute.xlu0 %261
    %v264 = vmul.f32 %v241, %v262
    %266 = vrot.lane.b32.xlu0 %v264, 64
    %v267 = vpop.permute.xlu0 %266
    %s269 = scalar_lea.vmem [#allocation11], 1
    %270 = vst.msk [vmem:[%s269] sm:$0x1] %vm172, %v267
    %272 = vrot.lane.b32.xlu0 %v258, 96
    %v273 = vpop.permute.xlu0 %272
    %s275 = scalar_lea.vmem [#allocation13], 1
    %276 = vst.msk [vmem:[%s275] sm:$0x1] %vm172, %v273
    %v277 = vld [vmem:[%s6] sm:$0xff]
    %v278 = vld [vmem:[%s6 + $0x8] sm:$0xff]
    %v279 = vld [vmem:[%s6 + $0x10] sm:$0xff]
    %v280 = vld [vmem:[%s6 + $0x18] sm:$0xff]
    %v281 = vld [vmem:[%s7] sm:$0x1]
    %v282 = vsel %vm91, %v267, 0
    %284 = vmatpush.msra.mxu0 0.0
    %285 = vmatpush.msra.mxu0 0.0
    %286 = vmatpush.msra.mxu0 0.0
    %287 = vmatpush.msra.mxu0 0.0
    %288 = vmatpush.msra.mxu0 0.0
    %289 = vmatpush.msra.mxu0 0.0
    %290 = vmatpush.msra.mxu0 0.0
    %291 = vmatpush.msra.mxu0 0.0
    %292 = vmatpush.msra.mxu0 0.0
    %293 = vmatpush.msra.mxu0 0.0
    %294 = vmatpush.msra.mxu0 0.0
    %295 = vmatpush.msra.mxu0 0.0
    %296 = vmatpush.msra.mxu0 %v280
    %297 = vmatpush.msra.mxu0 %v279
    %298 = vmatpush.msra.mxu0 %v278
    %299 = vmatpush.msra.mxu0 %v277
    %300 = vmatmul.f32.gmra.mxu0 %v282
    %v301 = vpop.f32.mrf.mxu0
    %v302 = vadd.f32 %v281, %v301
    %303 = vdwg.mxu0
    %vm304 = vcmask 516096
    %v305 = vsel %vm304, %v302, -inf
    %306 = vmax.xlane.f32.xlu0 %v305
    %v307 = vpop.xlane.xlu0 %306
    %v308 = vsub.f32 %v302, %v307
    %v309 = vmul.f32 %v308, 1.442695
    %v310 = vpow.pop %v309
    %v311 = vsel %vm304, %v310, 0.0
    %312 = vadd.xlane.f32.xlu0 %v311
    %v313 = vpop.xlane.xlu0 %312
    %v314 = vlog2.pop %v313
    %v315 = vmul.f32 %v314, 0.6931472
    %v316 = vsub.f32 %v308, %v315
    %317 = vst.msk [vmem:[#allocation10] sm:$0x1] %vm304, %v316
    // Predicated region
    $region42: #{decoder_forward.1} parent=1 // pred_check
      _
    $region43: #{decoder_forward.1} parent=1 // pred_check_branch
      %319 = sbr.rel (0) target = $region45
    $region44: #{decoder_forward.1} parent=1 // pred_region
      %321 = vsyncadd [#allocation6], 0
      %s323 = sshll.u32 [#allocation10], 4
      %s324 = int_to_ptr.vmem [resolvable:$true] %s323
      %s325 = sshll.u32 %s8, 4
      %s326 = int_to_ptr.hbm [resolvable:$true] %s325
      %328 = dma.vmem_to_hbm [thread:$0]  %s324, 16, %s326, [#allocation6]
    $region45: #{decoder_forward.1} parent=1 // pred_fallthru
      _
    // Predicated region
    $region46: #{decoder_forward.1} parent=1 // pred_check
      _
    $region47: #{decoder_forward.1} parent=1 // pred_check_branch
      %330 = sbr.rel (0) target = $region49
    $region48: #{decoder_forward.1} parent=1 // pred_region
      %332 = vsyncadd [#allocation12], 0
      %s333 = sshll.u32 [#allocation11], 4
      %s334 = int_to_ptr.vmem [resolvable:$true] %s333
      %s335 = sshll.u32 %s9, 4
      %s336 = int_to_ptr.hbm [resolvable:$true] %s335
      %341 = dma.vmem_to_hbm [thread:$0]  %s334, 32, %s336, [#allocation12], 16, 16, 1
    $region49: #{decoder_forward.1} parent=1 // pred_fallthru
      _
    // Predicated region
    $region50: #{decoder_forward.1} parent=1 // pred_check
      _
    $region51: #{decoder_forward.1} parent=1 // pred_check_branch
      %343 = sbr.rel (0) target = $region53
    $region52: #{decoder_forward.1} parent=1 // pred_region
      %345 = vsyncadd [#allocation12], 0
      %s346 = sshll.u32 [#allocation13], 4
      %s347 = int_to_ptr.vmem [resolvable:$true] %s346
      %s348 = sshll.u32 %s10, 4
      %s349 = int_to_ptr.hbm [resolvable:$true] %s348
      %354 = dma.vmem_to_hbm [thread:$0]  %s347, 32, %s349, [#allocation12], 16, 16, 1
    $region53: #{decoder_forward.1} parent=1 // pred_fallthru
      _
    // Predicated region
    $region54: #{decoder_forward.1} parent=1 // pred_check
      _
    $region55: #{decoder_forward.1} parent=1 // pred_check_branch
      %356 = sbr.rel (0) target = $region57
    $region56: #{decoder_forward.1} parent=1 // pred_region
      %358 = dma.done [#allocation6], 16
    $region57: #{decoder_forward.1} parent=1 // pred_fallthru
      _
    // Predicated region
    $region58: #{decoder_forward.1} parent=1 // pred_check
      _
    $region59: #{decoder_forward.1} parent=1 // pred_check_branch
      %360 = sbr.rel (0) target = $region61
    $region60: #{decoder_forward.1} parent=1 // pred_region
      %362 = dma.done [#allocation12], 32
    $region61: #{decoder_forward.1} parent=1 // pred_fallthru
      _
    // Predicated region
    $region62: #{decoder_forward.1} parent=1 // pred_check
      _
    $region63: #{decoder_forward.1} parent=1 // pred_check_branch
      %364 = sbr.rel (0) target = $region65
    $region64: #{decoder_forward.1} parent=1 // pred_region
      %366 = dma.done [#allocation12], 32
    $region65: #{decoder_forward.1} parent=1 // pred_fallthru
      _
    %367 = vsyncpa [#allocation5], 1
    %368 = vsyncpa [#allocation8], 1
    %369 = vsyncpa [#allocation6], 1
    %370 = vsyncpa [#allocation12], 1

</llo_original>
